<compile_context>
chip_gen: v7x
topology: tpu7x:2x2x1
jax: 0.10.0
libtpu: 0.0.40
codegen_flags: <defaults>
</compile_context>

<pallas_src>
import functools
import math

import jax
import jax.numpy as jnp
from jax.experimental import pallas as pl
from jax.experimental.pallas import tpu as pltpu


def _round_up(x, m):
    return (x + m - 1) // m * m


def _pick_tile(dim, pref, unit):
    """Largest tile (multiple of `unit`, <= pref) with <=12.5% padding waste,
    otherwise the waste-minimizing tile.  Never falls back to a whole huge dim."""
    d = _round_up(dim, unit)
    if d <= pref:
        return d
    best_t, best_waste = unit, None
    for t in range(pref, unit - 1, -unit):
        waste = _round_up(d, t) - d
        if waste * 8 <= d:
            return t
        if best_waste is None or waste < best_waste:
            best_t, best_waste = t, waste
    return best_t


def _equal_linear_kernel(scale, x_ref, w_ref, b_ref, o_ref):
    """f32 output: accumulate directly into the resident output tile.

    x_ref: (tm, tk)  w_ref: (tk, tn)  b_ref: (1, tn) f32  o_ref: (tm, tn) f32
    """
    k = pl.program_id(2)
    part = jnp.dot(x_ref[...], w_ref[...], preferred_element_type=jnp.float32)

    @pl.when(k == 0)
    def _():
        o_ref[...] = part

    @pl.when(k > 0)
    def _():
        o_ref[...] += part

    @pl.when(k == pl.num_programs(2) - 1)
    def _():
        # Equal-LR scale + bias folded into the cheap epilogue.
        o_ref[...] = o_ref[...] * scale + b_ref[...]


def _equal_linear_kernel_acc(scale, x_ref, w_ref, b_ref, o_ref, acc_ref):
    """Low-precision output: accumulate in an f32 VMEM scratch, cast at the end."""
    k = pl.program_id(2)
    part = jnp.dot(x_ref[...], w_ref[...], preferred_element_type=jnp.float32)

    @pl.when(k == 0)
    def _():
        acc_ref[...] = part

    @pl.when(k > 0)
    def _():
        acc_ref[...] += part

    @pl.when(k == pl.num_programs(2) - 1)
    def _():
        o_ref[...] = (acc_ref[...] * scale + b_ref[...]).astype(o_ref.dtype)


# Double-buffered tile footprint cap.  v7x (64 MiB physical VMEM per TC) is the
# binding constraint; v5e/v6e have 128 MiB so this is conservative there.
_VMEM_BUDGET = 40 * 1024 * 1024


def equal_linear(x, weight_orig, bias, *, weight_layout="oi",
                 compute_dtype=None, tm=512, tn=512):
    """EqualLinear forward.

    x: (batch, in_dim)
    weight_orig: (out_dim, in_dim) if weight_layout == "oi" (PyTorch layout),
                 or (in_dim, out_dim) if "io" (pre-transposed / cached).
    bias: (out_dim,)
    compute_dtype: optional dtype for the MXU operands (e.g. jnp.bfloat16);
                   accumulation is always f32.
    """
    batch, in_dim = x.shape
    if weight_layout == "oi":
        out_dim, k2 = weight_orig.shape
        w_io = weight_orig.T  # one-time XLA transpose; cache & pass "io" in prod
    else:
        k2, out_dim = weight_orig.shape
        w_io = weight_orig
    assert k2 == in_dim, "weight / in_dim mismatch"
    assert bias.shape == (out_dim,)

    # fan_in = in_dim * weight[0][0].numel() == in_dim for nn.Linear.
    scale = float(math.sqrt(2.0 / in_dim))  # trace-time constant

    out_dtype = x.dtype
    cd = jnp.dtype(compute_dtype) if compute_dtype is not None else jnp.dtype(x.dtype)
    cd_size = cd.itemsize
    out_size = jnp.dtype(out_dtype).itemsize
    use_acc = jnp.dtype(out_dtype) != jnp.dtype(jnp.float32)

    # --- tile selection (pad ragged dims; cap double-buffered VMEM footprint) ---
    tm = _pick_tile(batch, tm, 8)
    tn = _pick_tile(out_dim, tn, 128)
    fixed = 2 * tm * tn * out_size + 2 * tn * 4 + (tm * tn * 4 if use_acc else 0)
    per_k = 2 * (tm + tn) * cd_size                       # x + w tiles, double-buffered
    max_tk = max(128, ((_VMEM_BUDGET - fixed) // per_k) // 128 * 128)
    kp0 = _round_up(in_dim, 128)
    ksteps = -(-kp0 // max_tk)
    tk = _round_up(-(-kp0 // ksteps), 128)
    ksteps = -(-kp0 // tk)

    mp, np_, kp = _round_up(batch, tm), _round_up(out_dim, tn), tk * ksteps
    footprint = fixed + per_k * tk
    assert footprint <= _VMEM_BUDGET, (footprint, _VMEM_BUDGET)

    # --- pad operands (zero padding is exact for matmul + bias add) ---
    xc = x.astype(cd) if x.dtype != cd else x
    wc = w_io.astype(cd) if w_io.dtype != cd else w_io
    if (mp, kp) != (batch, in_dim):
        xc = jnp.pad(xc, ((0, mp - batch), (0, kp - in_dim)))
    if (kp, np_) != (in_dim, out_dim):
        wc = jnp.pad(wc, ((0, kp - in_dim), (0, np_ - out_dim)))
    b2d = bias.astype(jnp.float32).reshape(1, out_dim)
    if np_ != out_dim:
        b2d = jnp.pad(b2d, ((0, 0), (0, np_ - out_dim)))

    # N outermost (v7x megacore shards weight rows), M middle, K reduction last.
    grid = (np_ // tn, mp // tm, ksteps)
    kernel = functools.partial(
        _equal_linear_kernel_acc if use_acc else _equal_linear_kernel, scale)
    scratch = [pltpu.VMEM((tm, tn), jnp.float32)] if use_acc else []

    out = pl.pallas_call(
        kernel,
        out_shape=jax.ShapeDtypeStruct((mp, np_), out_dtype),
        grid_spec=pltpu.PrefetchScalarGridSpec(
            num_scalar_prefetch=0,
            grid=grid,
            in_specs=[
                # x tile follows (M, K).
                pl.BlockSpec((tm, tk), lambda j, i, k: (i, k)),
                # Weight tile follows (K, N) only — independent of the M axis,
                # so with ksteps == 1 (typical EqualLinear) it stays
                # VMEM-resident across consecutive batch tiles.
                pl.BlockSpec((tk, tn), lambda j, i, k: (k, j)),
                # Bias tile follows N only.
                pl.BlockSpec((1, tn), lambda j, i, k: (0, j)),
            ],
            out_specs=pl.BlockSpec((tm, tn), lambda j, i, k: (i, j)),
            scratch_shapes=scratch,
        ),
        compiler_params=pltpu.CompilerParams(
            dimension_semantics=("parallel", "parallel", "arbitrary"),
            vmem_limit_bytes=int(min(max(2 * footprint, 32 << 20), 56 << 20)),
        ),
        cost_estimate=pl.CostEstimate(
            flops=2 * mp * np_ * kp,
            transcendentals=0,
            bytes_accessed=cd_size * (mp * kp + kp * np_) + out_size * mp * np_,
        ),
    )(xc, wc, b2d)

    if (mp, np_) != (batch, out_dim):
        out = out[:batch, :out_dim]
    return out


if __name__ == "__main__":
    key = jax.random.PRNGKey(0)
    k_x, k_w, k_x2, k_w2, k_xb, k_wb = jax.random.split(key, 6)

    # --- small shapes consistent with the module (single-tile path) ---
    batch, in_dim, out_dim = 8, 32, 16
    x = jax.random.normal(k_x, (batch, in_dim), dtype=jnp.float32)
    weight_orig = jax.random.normal(k_w, (out_dim, in_dim), dtype=jnp.float32)  # .normal_()
    bias = jnp.zeros((out_dim,), dtype=jnp.float32)                             # .zero_()

    out = equal_linear(x, weight_orig, bias)
    jax.block_until_ready(out)
    ref = x @ (weight_orig * math.sqrt(2.0 / in_dim)).T + bias
    assert out.shape == (batch, out_dim)
    assert jnp.allclose(out, ref, atol=1e-5, rtol=1e-5), "mismatch (small shapes)"

    # --- ragged, tiled path: exercises zero-padding, M tiling, resident weight ---
    B2, K2, N2 = 640, 300, 384
    x2 = jax.random.normal(k_x2, (B2, K2), dtype=jnp.float32)
    w2 = jax.random.normal(k_w2, (N2, K2), dtype=jnp.float32)
    b2 = jnp.zeros((N2,), dtype=jnp.float32)
    out2 = equal_linear(x2, w2, b2)
    jax.block_until_ready(out2)
    ref2 = x2 @ (w2 * math.sqrt(2.0 / K2)).T + b2
    assert out2.shape == (B2, N2)
    assert jnp.allclose(out2, ref2, atol=1e-3, rtol=1e-3), "mismatch (tiled shapes)"

    # --- bf16 end-to-end: exercises the f32-scratch accumulator epilogue ---
    xb = jax.random.normal(k_xb, (batch, in_dim), dtype=jnp.float32).astype(jnp.bfloat16)
    wb = jax.random.normal(k_wb, (out_dim, in_dim), dtype=jnp.float32).astype(jnp.bfloat16)
    bb = jnp.zeros((out_dim,), dtype=jnp.bfloat16)
    outb = equal_linear(xb, wb, bb)
    jax.block_until_ready(outb)
    refb = xb.astype(jnp.float32) @ (wb.astype(jnp.float32) * math.sqrt(2.0 / in_dim)).T
    assert outb.dtype == jnp.bfloat16
    assert jnp.allclose(outb.astype(jnp.float32), refb, atol=2e-2, rtol=2e-2), "mismatch (bf16)"

    print("KERNEL_OK")
</pallas_src>

<mosaic_0001>
module attributes {stable_mosaic.version = 11 : i64} {
  func.func @_equal_linear_kernel(%arg0: i32, %arg1: i32, %arg2: i32, %arg3: memref<8x128xf32, #tpu.memory_space<vmem>>, %arg4: memref<128x128xf32, #tpu.memory_space<vmem>>, %arg5: memref<1x128xf32, #tpu.memory_space<vmem>>, %arg6: memref<8x128xf32, #tpu.memory_space<vmem>>) attributes {dimension_semantics = [#tpu.dimension_semantics<parallel>, #tpu.dimension_semantics<parallel>, #tpu.dimension_semantics<arbitrary>], iteration_bounds = array<i64: 1, 1, 1>, scalar_prefetch = 0 : i64, scratch_operands = 0 : i64, tpu.core_type = #tpu.core_type<tc>, window_params = [{transform_indices = @transform_0, window_bounds = array<i64: 8, 128>}, {transform_indices = @transform_1, window_bounds = array<i64: 128, 128>}, {transform_indices = @transform_2, window_bounds = array<i64: 1, 128>}, {transform_indices = @transform_3, window_bounds = array<i64: 8, 128>}]} {
    %c0 = arith.constant 0 : index
    %c0_0 = arith.constant 0 : index
    %0 = vector.load %arg3[%c0, %c0_0] : memref<8x128xf32, #tpu.memory_space<vmem>>, vector<8x128xf32>
    %c0_1 = arith.constant 0 : index
    %c0_2 = arith.constant 0 : index
    %1 = vector.load %arg4[%c0_1, %c0_2] : memref<128x128xf32, #tpu.memory_space<vmem>>, vector<128x128xf32>
    %cst = arith.constant dense<0.000000e+00> : vector<8x128xf32>
    %2 = tpu.matmul %0, %1, %cst {dimension_numbers = #tpu.dot_dimension_numbers<[1], [0], [0], [1], [0, 0, 1, 1], [], []>} : vector<8x128xf32>, vector<128x128xf32>, vector<8x128xf32> -> vector<8x128xf32>
    %c0_i32 = arith.constant 0 : i32
    %3 = arith.cmpi eq, %arg2, %c0_i32 : i32
    %4 = arith.extui %3 : i1 to i32
    %c0_i32_3 = arith.constant 0 : i32
    %5 = arith.cmpi ne, %4, %c0_i32_3 : i32
    scf.if %5 {
      %c0_8 = arith.constant 0 : index
      %c0_9 = arith.constant 0 : index
      %12 = vector.load %arg6[%c0_8, %c0_9] : memref<8x128xf32, #tpu.memory_space<vmem>>, vector<8x128xf32>
      tpu.vector_store %arg6[%c0_8, %c0_9], %2 {strides = array<i32>} : memref<8x128xf32, #tpu.memory_space<vmem>>, vector<8x128xf32>,
    } else {
    }
    %c0_i32_4 = arith.constant 0 : i32
    %6 = arith.cmpi sgt, %arg2, %c0_i32_4 : i32
    %7 = arith.extui %6 : i1 to i32
    %c0_i32_5 = arith.constant 0 : i32
    %8 = arith.cmpi ne, %7, %c0_i32_5 : i32
    scf.if %8 {
      %c0_8 = arith.constant 0 : index
      %c0_9 = arith.constant 0 : index
      %12 = vector.load %arg6[%c0_8, %c0_9] : memref<8x128xf32, #tpu.memory_space<vmem>>, vector<8x128xf32>
      %13 = arith.addf %12, %2 : vector<8x128xf32>
      %c0_10 = arith.constant 0 : index
      %c0_11 = arith.constant 0 : index
      %14 = vector.load %arg6[%c0_10, %c0_11] : memref<8x128xf32, #tpu.memory_space<vmem>>, vector<8x128xf32>
      tpu.vector_store %arg6[%c0_10, %c0_11], %13 {strides = array<i32>} : memref<8x128xf32, #tpu.memory_space<vmem>>, vector<8x128xf32>,
    } else {
    }
    %c0_i32_6 = arith.constant 0 : i32
    %9 = arith.cmpi eq, %arg2, %c0_i32_6 : i32
    %10 = arith.extui %9 : i1 to i32
    %c0_i32_7 = arith.constant 0 : i32
    %11 = arith.cmpi ne, %10, %c0_i32_7 : i32
    scf.if %11 {
      %c0_8 = arith.constant 0 : index
      %c0_9 = arith.constant 0 : index
      %12 = vector.load %arg6[%c0_8, %c0_9] : memref<8x128xf32, #tpu.memory_space<vmem>>, vector<8x128xf32>
      %cst_10 = arith.constant 2.500000e-01 : f32
      %13 = vector.broadcast %cst_10 : f32 to vector<8x128xf32>
      %14 = arith.mulf %12, %13 : vector<8x128xf32>
      %c0_11 = arith.constant 0 : index
      %c0_12 = arith.constant 0 : index
      %15 = vector.load %arg5[%c0_11, %c0_12] : memref<1x128xf32, #tpu.memory_space<vmem>>, vector<1x128xf32>
      %16 = vector.broadcast %15 : vector<1x128xf32> to vector<8x128xf32>
      %17 = arith.addf %14, %16 : vector<8x128xf32>
      %c0_13 = arith.constant 0 : index
      %c0_14 = arith.constant 0 : index
      %18 = vector.load %arg6[%c0_13, %c0_14] : memref<8x128xf32, #tpu.memory_space<vmem>>, vector<8x128xf32>
      tpu.vector_store %arg6[%c0_13, %c0_14], %17 {strides = array<i32>} : memref<8x128xf32, #tpu.memory_space<vmem>>, vector<8x128xf32>,
    } else {
    }
    return
  }
  func.func @transform_0(%arg0: i32, %arg1: i32, %arg2: i32) -> (i32, i32) {
    %c0_i32 = arith.constant 0 : i32
    return %arg1, %arg2 : i32, i32
  }
  func.func @transform_1(%arg0: i32, %arg1: i32, %arg2: i32) -> (i32, i32) {
    %c0_i32 = arith.constant 0 : i32
    return %arg2, %arg0 : i32, i32
  }
  func.func @transform_2(%arg0: i32, %arg1: i32, %arg2: i32) -> (i32, i32) {
    %c0_i32 = arith.constant 0 : i32
    %c0_i32_0 = arith.constant 0 : i32
    return %c0_i32, %arg0 : i32, i32
  }
  func.func @transform_3(%arg0: i32, %arg1: i32, %arg2: i32) -> (i32, i32) {
    %c0_i32 = arith.constant 0 : i32
    return %arg1, %arg0 : i32, i32
  }
}

</mosaic_0001>

<llo_original>
// kernel: tpu_custom_call.1
$region0: #{tpu_custom_call.1}
  #allocation0 [shape = 'u32[]', space=smem, size = 0x4, offset = 0x4, fixed_abs, tag = 'smem constant byte address 0x4 - core index']
  #allocation1 [shape = 'u32[144,128]{1,0:T(1,128)}', space=vmem, size = 0x12000, scoped, tag = 'internal scratch']
  %s0 = inlined_call_operand.hbm [shape: f32[8,128], index: 0, kind: input, shape index: {}]
  %s1 = inlined_call_operand.hbm [shape: f32[128,128], index: 1, kind: input, shape index: {}]
  %s2 = inlined_call_operand.vmem [shape: f32[1,128], index: 2, kind: input, shape index: {}]
  %s3 = inlined_call_operand.hbm [shape: f32[8,128], index: 3, kind: output, shape index: {}]
  %s4 = sld [smem:[#allocation0]]
  $region42: #{tpu_custom_call.1} parent=0
    _
  %s6 = ssub.s32 1, %s4
  %s7 = scalar_select 0, %s6, %s4
  $region1: #{tpu_custom_call.1} parent=0
    #allocation2 [shape = 'u8[4096]{0}', space=vmem, size = 0x1000, scoped, tag = 'input window, operand 0, single buffered']
    #allocation3 [shape = 's32[1]{0}', space=sflag, size = 0x4, scoped, tag = 'scoped memory for tpu_custom_call.1']
    #allocation4 [shape = 's32[1]{0}', space=sflag, size = 0x4, scoped, tag = 'scoped memory for tpu_custom_call.1']
    #allocation5 [shape = 'u8[65536]{0}', space=vmem, size = 0x10000, scoped, tag = 'input window, operand 1, single buffered']
    #allocation6 [shape = 's32[1]{0}', space=sflag, size = 0x4, scoped, tag = 'scoped memory for tpu_custom_call.1']
    #allocation7 [shape = 'u8[4096]{0}', space=vmem, size = 0x1000, scoped, tag = 'output window, operand 0, single buffered']
    %8 = vsyncpa [#allocation3], 0
    %9 = vsyncpa [#allocation6], 0
    %10 = vsyncpa [#allocation4], 0
    // Predicated region
    $region2: #{tpu_custom_call.1} parent=1 // pred_check
      _
    $region3: #{tpu_custom_call.1} parent=1 // pred_check_branch
      %12 = sbr.rel (0) target = $region5
    $region4: #{tpu_custom_call.1} parent=1 // pred_region
      %s14 = ssub.s32 128, 128
      %15 = vsyncadd [#allocation3], %s14
      %s17 = sshll.u32 [#allocation2], 4
      %s18 = int_to_ptr.vmem [resolvable:$true] %s17
      %20 = dma.hbm_to_vmem [thread:$0]  %s0, 128, %s18, [#allocation3]
    $region5: #{tpu_custom_call.1} parent=1 // pred_fallthru
      _
    // Predicated region
    $region6: #{tpu_custom_call.1} parent=1 // pred_check
      _
    $region7: #{tpu_custom_call.1} parent=1 // pred_check_branch
      %22 = sbr.rel (0) target = $region9
    $region8: #{tpu_custom_call.1} parent=1 // pred_region
      %s24 = ssub.s32 2048, 2048
      %25 = vsyncadd [#allocation6], %s24
      %s26 = sshll.u32 [#allocation5], 4
      %s27 = int_to_ptr.vmem [resolvable:$true] %s26
      %32 = dma.hbm_to_vmem [thread:$0]  %s1, 2048, %s27, [#allocation6], 128, 128, 8
    $region9: #{tpu_custom_call.1} parent=1 // pred_fallthru
      _
    // Predicated region
    $region10: #{tpu_custom_call.1} parent=1 // pred_check
      _
    $region11: #{tpu_custom_call.1} parent=1 // pred_check_branch
      %34 = sbr.rel (0) target = $region13
    $region12: #{tpu_custom_call.1} parent=1 // pred_region
      _
    $region13: #{tpu_custom_call.1} parent=1 // pred_fallthru
      _
    // Predicated region
    $region14: #{tpu_custom_call.1} parent=1 // pred_check
      _
    $region15: #{tpu_custom_call.1} parent=1 // pred_check_branch
      %36 = sbr.rel (0) target = $region17
    $region16: #{tpu_custom_call.1} parent=1 // pred_region
      %37 = dma.done [#allocation3], 128
    $region17: #{tpu_custom_call.1} parent=1 // pred_fallthru
      _
    // Predicated region
    $region18: #{tpu_custom_call.1} parent=1 // pred_check
      _
    $region19: #{tpu_custom_call.1} parent=1 // pred_check_branch
      %39 = sbr.rel (0) target = $region21
    $region20: #{tpu_custom_call.1} parent=1 // pred_region
      %40 = dma.done [#allocation6], 2048
    $region21: #{tpu_custom_call.1} parent=1 // pred_fallthru
      _
    %v41 = vld [vmem:[#allocation2] sm:$0xff]
    %v42 = vld [vmem:[#allocation5] sm:$0xff]
    %v43 = vld [vmem:[#allocation5 + $0x8] sm:$0xff]
    %v44 = vld [vmem:[#allocation5 + $0x10] sm:$0xff]
    %v45 = vld [vmem:[#allocation5 + $0x18] sm:$0xff]
    %v46 = vld [vmem:[#allocation5 + $0x20] sm:$0xff]
    %v47 = vld [vmem:[#allocation5 + $0x28] sm:$0xff]
    %v48 = vld [vmem:[#allocation5 + $0x30] sm:$0xff]
    %v49 = vld [vmem:[#allocation5 + $0x38] sm:$0xff]
    %v50 = vld [vmem:[#allocation5 + $0x40] sm:$0xff]
    %v51 = vld [vmem:[#allocation5 + $0x48] sm:$0xff]
    %v52 = vld [vmem:[#allocation5 + $0x50] sm:$0xff]
    %v53 = vld [vmem:[#allocation5 + $0x58] sm:$0xff]
    %v54 = vld [vmem:[#allocation5 + $0x60] sm:$0xff]
    %v55 = vld [vmem:[#allocation5 + $0x68] sm:$0xff]
    %v56 = vld [vmem:[#allocation5 + $0x70] sm:$0xff]
    %v57 = vld [vmem:[#allocation5 + $0x78] sm:$0xff]
    %58 = vmatprep.subr.mxu0 0.0
    %59 = vmatpush1.msra.mxu0 %v42
    %60 = vmatprep.subr.mxu0 0.0
    %61 = vmatpush1.msra.mxu0 %v43
    %62 = vmatprep.subr.mxu0 0.0
    %63 = vmatpush1.msra.mxu0 %v44
    %64 = vmatprep.subr.mxu0 0.0
    %65 = vmatpush1.msra.mxu0 %v45
    %66 = vmatprep.subr.mxu0 0.0
    %67 = vmatpush1.msra.mxu0 %v46
    %68 = vmatprep.subr.mxu0 0.0
    %69 = vmatpush1.msra.mxu0 %v47
    %70 = vmatprep.subr.mxu0 0.0
    %71 = vmatpush1.msra.mxu0 %v48
    %72 = vmatprep.subr.mxu0 0.0
    %73 = vmatpush1.msra.mxu0 %v49
    %74 = vmatprep.subr.mxu0 0.0
    %75 = vmatpush1.msra.mxu0 %v50
    %76 = vmatprep.subr.mxu0 0.0
    %77 = vmatpush1.msra.mxu0 %v51
    %78 = vmatprep.subr.mxu0 0.0
    %79 = vmatpush1.msra.mxu0 %v52
    %80 = vmatprep.subr.mxu0 0.0
    %81 = vmatpush1.msra.mxu0 %v53
    %82 = vmatprep.subr.mxu0 0.0
    %83 = vmatpush1.msra.mxu0 %v54
    %84 = vmatprep.subr.mxu0 0.0
    %85 = vmatpush1.msra.mxu0 %v55
    %86 = vmatprep.subr.mxu0 0.0
    %87 = vmatpush1.msra.mxu0 %v56
    %88 = vmatprep.subr.mxu0 0.0
    %89 = vmatpush1.msra.mxu0 %v57
    %90 = vmatprep.subr.mxu0 0.0
    %91 = vmatpush1.msra.mxu0 0.0
    %92 = vmatprep.subr.mxu0 0.0
    %93 = vmatpush1.msra.mxu0 0.0
    %94 = vmatprep.subr.mxu0 0.0
    %95 = vmatpush1.msra.mxu0 0.0
    %96 = vmatprep.subr.mxu0 0.0
    %97 = vmatpush1.msra.mxu0 0.0
    %98 = vmatprep.subr.mxu0 0.0
    %99 = vmatpush1.msra.mxu0 0.0
    %100 = vmatprep.subr.mxu0 0.0
    %101 = vmatpush1.msra.mxu0 0.0
    %102 = vmatprep.subr.mxu0 0.0
    %103 = vmatpush1.msra.mxu0 0.0
    %104 = vmatprep.subr.mxu0 0.0
    %105 = vmatpush1.msra.mxu0 0.0
    %106 = vmatprep.subr.mxu0 0.0
    %107 = vmatpush1.msra.mxu0 0.0
    %108 = vmatprep.subr.mxu0 0.0
    %109 = vmatpush1.msra.mxu0 0.0
    %110 = vmatprep.subr.mxu0 0.0
    %111 = vmatpush1.msra.mxu0 0.0
    %112 = vmatprep.subr.mxu0 0.0
    %113 = vmatpush1.msra.mxu0 0.0
    %114 = vmatprep.subr.mxu0 0.0
    %115 = vmatpush1.msra.mxu0 0.0
    %116 = vmatprep.subr.mxu0 0.0
    %117 = vmatpush1.msra.mxu0 0.0
    %118 = vmatprep.subr.mxu0 0.0
    %119 = vmatpush1.msra.mxu0 0.0
    %120 = vmatprep.subr.mxu0 0.0
    %121 = vmatpush1.msra.mxu0 0.0
    %122 = vmatprep.mubr.f32.mxu0 0.0
    %123 = vmatmul.mubr.f32.gmra.mrb[0].mxu0 %v41
    %v124 = vpop.f32.mrb[0].mxu0
    %v125 = vadd.f32 0.0, %v124
    %v126 = vpop.f32.mrb[0].mxu0
    %127 = vdwg.mxu0
    %p128 = scmp.eq.s32.totalorder 0, 0
    // Predicated region
    $region22: #{tpu_custom_call.1} parent=1 // pred_check
      %p129 = pneg %p128
    $region23: #{tpu_custom_call.1} parent=1 // pred_check_branch
      %131 = sbr.rel (%p129) target = $region25
    $region24: #{tpu_custom_call.1} parent=1 // pred_region
      %132 = vst [vmem:[#allocation7] sm:$0xff] %v125
    $region25: #{tpu_custom_call.1} parent=1 // pred_fallthru
      _
    %p133 = scmp.gt.s32.totalorder 0, 0
    // Predicated region
    $region26: #{tpu_custom_call.1} parent=1 // pred_check
      %p134 = pneg %p133
    $region27: #{tpu_custom_call.1} parent=1 // pred_check_branch
      %136 = sbr.rel (%p134) target = $region29
    $region28: #{tpu_custom_call.1} parent=1 // pred_region
      %v137 = vld [vmem:[#allocation7] sm:$0xff]
      %v138 = vadd.f32 %v137, %v125
      %139 = vst [vmem:[#allocation7] sm:$0xff] %v138
    $region29: #{tpu_custom_call.1} parent=1 // pred_fallthru
      _
    // Predicated region
    $region30: #{tpu_custom_call.1} parent=1 // pred_check
      %p140 = pneg %p128
    $region31: #{tpu_custom_call.1} parent=1 // pred_check_branch
      %142 = sbr.rel (%p140) target = $region33
    $region32: #{tpu_custom_call.1} parent=1 // pred_region
      %v143 = vld [vmem:[#allocation7] sm:$0xff]
      %v144 = vmul.f32 %v143, 0.25
      %v145 = vld [vmem:[%s2] sm:$0x1]
      %v147 = vlaneseq
      %v148 = vshrl.u32 %v147, 7
      %v149 = vsub.s32 0, %v148
      %v150 = vrot.slane %v145, %v149
      %v152 = vadd.f32 %v144, %v150
      %153 = vst [vmem:[#allocation7] sm:$0xff] %v152
    $region33: #{tpu_custom_call.1} parent=1 // pred_fallthru
      _
    // Predicated region
    $region34: #{tpu_custom_call.1} parent=1 // pred_check
      _
    $region35: #{tpu_custom_call.1} parent=1 // pred_check_branch
      %155 = sbr.rel (0) target = $region37
    $region36: #{tpu_custom_call.1} parent=1 // pred_region
      %s157 = ssub.s32 128, 128
      %158 = vsyncadd [#allocation4], %s157
      %s160 = sshll.u32 [#allocation7], 4
      %s161 = int_to_ptr.vmem [resolvable:$true] %s160
      %163 = dma.vmem_to_hbm [thread:$0]  %s161, 128, %s3, [#allocation4]
    $region37: #{tpu_custom_call.1} parent=1 // pred_fallthru
      _
    // Predicated region
    $region38: #{tpu_custom_call.1} parent=1 // pred_check
      _
    $region39: #{tpu_custom_call.1} parent=1 // pred_check_branch
      %165 = sbr.rel (0) target = $region41
    $region40: #{tpu_custom_call.1} parent=1 // pred_region
      %166 = dma.done [#allocation4], 128
    $region41: #{tpu_custom_call.1} parent=1 // pred_fallthru
      _
    %167 = vsyncpa [#allocation3], 1
    %168 = vsyncpa [#allocation6], 1
    %169 = vsyncpa [#allocation4], 1

</llo_original>
